<compile_context>
chip_gen: v7x
topology: tpu7x:2x2x1
jax: 0.10.0
libtpu: 0.0.40
codegen_flags: <defaults>
</compile_context>

<pallas_src>
import math
import functools
from typing import NamedTuple, Optional

import jax
import jax.numpy as jnp
from jax.experimental import pallas as pl
from jax.experimental.pallas import tpu as pltpu


# ---------------------------------------------------------------------------
# helpers
# ---------------------------------------------------------------------------
def _round_up(x, m):
    return ((x + m - 1) // m) * m


def _sublane_multiple(dtype):
    """Minimum second-to-last-dim tile multiple for this dtype (8/16/32)."""
    itemsize = jnp.dtype(dtype).itemsize
    return max(8, 8 * (4 // max(itemsize, 1)))


def _divisor_tile(dim, cap):
    """Largest multiple of 128 that divides `dim` (itself a 128-multiple) and is <= cap."""
    cap = max(cap, 128)
    m = dim // 128
    best = 128
    for d in range(1, m + 1):
        if m % d == 0 and d * 128 <= cap:
            best = d * 128
    return best


def _largest_proper_divisor(m):
    for d in range(m // 2, 0, -1):
        if m % d == 0:
            return d
    return 1


# ---------------------------------------------------------------------------
# kernels
# ---------------------------------------------------------------------------
def _equal_linear_kernel_1k(*refs, out_scale, activation, has_bias):
    """Single K-tile fast path: no accumulator scratch, no init/finalize."""
    if has_bias:
        x_ref, w_ref, b_ref, o_ref = refs
    else:
        x_ref, w_ref, o_ref = refs
        b_ref = None

    out = jnp.dot(x_ref[...], w_ref[...], preferred_element_type=jnp.float32)
    out = out * out_scale                    # equalized-lr scale (sqrt2 folded in)
    if has_bias:
        out = out + b_ref[...]               # bias already pre-scaled at prepare time
    if activation == "fused_lrelu":
        out = jnp.maximum(out, 0.2 * out)    # leaky relu; sqrt2 already folded in
    o_ref[...] = out.astype(o_ref.dtype)


def _equal_linear_kernel_mk(*refs, out_scale, activation, has_bias):
    """Multi K-tile path: f32 VMEM accumulator, K innermost reduction axis."""
    if has_bias:
        x_ref, w_ref, b_ref, o_ref, acc_ref = refs
    else:
        x_ref, w_ref, o_ref, acc_ref = refs
        b_ref = None

    k = pl.program_id(2)
    prod = jnp.dot(x_ref[...], w_ref[...], preferred_element_type=jnp.float32)

    @pl.when(k == 0)
    def _():
        acc_ref[...] = prod                  # direct assign: no zero-fill store+reload

    @pl.when(k > 0)
    def _():
        acc_ref[...] += prod

    @pl.when(k == pl.num_programs(2) - 1)
    def _():
        out = acc_ref[...] * out_scale
        if has_bias:
            out = out + b_ref[...]
        if activation == "fused_lrelu":
            out = jnp.maximum(out, 0.2 * out)
        o_ref[...] = out.astype(o_ref.dtype)


# ---------------------------------------------------------------------------
# one-time parameter prep (hoisted out of the per-call hot path)
# ---------------------------------------------------------------------------
class EqualLinearParams(NamedTuple):
    w_t: jax.Array                 # (Kp, Np): transposed, 128-padded weight
    b: Optional[jax.Array]         # (1, Np) f32, pre-scaled by lr_mul (* sqrt2), or None
    in_dim: int
    out_dim: int
    out_scale: float               # scale * (sqrt2 if activated)
    activation: Optional[str]


def prepare_equal_linear(weight, bias=None, *, lr_mul=1.0, activation=None,
                         param_dtype=None):
    """Do the weight transpose/pad (+ optional bf16 cast) and bias pre-scaling ONCE."""
    out_dim, in_dim = weight.shape
    Kp = _round_up(in_dim, 128)
    Np = _round_up(out_dim, 128)

    scale = lr_mul / math.sqrt(in_dim)
    act_scale = math.sqrt(2.0) if activation == "fused_lrelu" else 1.0

    w_t = jnp.swapaxes(jnp.asarray(weight), 0, 1)          # (in_dim, out_dim)
    if param_dtype is not None:
        w_t = w_t.astype(param_dtype)
    if (Kp, Np) != (in_dim, out_dim):
        w_t = jnp.pad(w_t, ((0, Kp - in_dim), (0, Np - out_dim)))

    b = None
    if bias is not None:
        b = (jnp.asarray(bias).astype(jnp.float32) * (lr_mul * act_scale)).reshape(1, out_dim)
        if Np != out_dim:
            b = jnp.pad(b, ((0, 0), (0, Np - out_dim)))

    return EqualLinearParams(w_t, b, in_dim, out_dim, scale * act_scale, activation)


# ---------------------------------------------------------------------------
# per-call forward
# ---------------------------------------------------------------------------
def equal_linear(params: EqualLinearParams, x, *, tm=256, tn=512, tk=2048):
    """x: (B, in_dim).  Returns (B, out_dim) in x.dtype."""
    B, in_dim = x.shape
    if in_dim != params.in_dim:
        raise ValueError(f"in_dim mismatch: {in_dim} vs {params.in_dim}")
    Kp, Np = params.w_t.shape
    has_bias = params.b is not None

    # --- tile planning (dtype-aware sublane alignment; tiles divide padded dims) ---
    sub = _sublane_multiple(x.dtype)
    tm = min(max(tm, sub), _round_up(B, sub))
    tm = _round_up(tm, sub)
    Mp = _round_up(B, tm)

    tk = Kp if Kp <= max(tk, 128) else _divisor_tile(Kp, tk)   # single-K when it fits
    tn = _divisor_tile(Np, tn)

    # v7x megacore: avoid a degenerate (1, 1[, K]) grid so both TensorCores run.
    if (Mp // tm) * (Np // tn) == 1 and Np // 128 >= 2:
        tn = 128 * _largest_proper_divisor(Np // 128)

    grid_m, grid_n, grid_k = Mp // tm, Np // tn, Kp // tk

    # --- pad only the (small) activation; weight/bias were padded once in prepare ---
    x_p = x
    if (Mp, Kp) != (B, in_dim):
        x_p = jnp.pad(x, ((0, Mp - B), (0, Kp - in_dim)))

    out_dtype = x.dtype

    # --- VMEM guardrail (double-buffered in/out + f32 accumulator), v7x-safe limit ---
    est = 2 * (tm * tk * jnp.dtype(x.dtype).itemsize
               + tk * tn * jnp.dtype(params.w_t.dtype).itemsize
               + tm * tn * jnp.dtype(out_dtype).itemsize)
    if grid_k > 1:
        est += tm * tn * 4
    if has_bias:
        est += 2 * tn * 4
    vmem_limit = int(min(48 * 2**20, max(2 * est, 32 * 2**20)))

    args = [x_p, params.w_t]

    if grid_k == 1:
        kernel = functools.partial(
            _equal_linear_kernel_1k, out_scale=params.out_scale,
            activation=params.activation, has_bias=has_bias)
        in_specs = [pl.BlockSpec((tm, Kp), lambda i, j: (i, 0)),
                    pl.BlockSpec((Kp, tn), lambda i, j: (0, j))]
        if has_bias:
            args.append(params.b)
            in_specs.append(pl.BlockSpec((1, tn), lambda i, j: (0, j)))
        grid = (grid_m, grid_n)
        out_spec = pl.BlockSpec((tm, tn), lambda i, j: (i, j))
        scratch = []
        dims = ("parallel", "parallel")
    else:
        kernel = functools.partial(
            _equal_linear_kernel_mk, out_scale=params.out_scale,
            activation=params.activation, has_bias=has_bias)
        in_specs = [pl.BlockSpec((tm, tk), lambda i, j, k: (i, k)),
                    pl.BlockSpec((tk, tn), lambda i, j, k: (k, j))]
        if has_bias:
            args.append(params.b)
            in_specs.append(pl.BlockSpec((1, tn), lambda i, j, k: (0, j)))
        grid = (grid_m, grid_n, grid_k)
        out_spec = pl.BlockSpec((tm, tn), lambda i, j, k: (i, j))
        scratch = [pltpu.VMEM((tm, tn), jnp.float32)]
        dims = ("parallel", "parallel", "arbitrary")

    out_p = pl.pallas_call(
        kernel,
        out_shape=jax.ShapeDtypeStruct((Mp, Np), out_dtype),
        grid_spec=pltpu.PrefetchScalarGridSpec(
            num_scalar_prefetch=0,
            grid=grid,
            in_specs=in_specs,
            out_specs=out_spec,
            scratch_shapes=scratch),
        compiler_params=pltpu.CompilerParams(
            dimension_semantics=dims,
            vmem_limit_bytes=vmem_limit),
    )(*args)

    return out_p[:B, :params.out_dim]


# ---------------------------------------------------------------------------
# pure-JAX reference (mirrors the PyTorch forward)
# ---------------------------------------------------------------------------
def equal_linear_ref(x, weight, bias, *, lr_mul=1.0, activation=None):
    scale = math.sqrt(1) / math.sqrt(x.shape[-1]) * lr_mul
    out = x.astype(jnp.float32) @ (weight.astype(jnp.float32) * scale).T
    b = (jnp.zeros((weight.shape[0],), jnp.float32) if bias is None
         else bias.astype(jnp.float32)) * lr_mul
    out = out + b
    if activation == "fused_lrelu":
        out = jnp.where(out >= 0, out, 0.2 * out) * (2.0 ** 0.5)
    return out.astype(x.dtype)


# ---------------------------------------------------------------------------
# demo / self-test
# ---------------------------------------------------------------------------
if __name__ == "__main__":
    key = jax.random.PRNGKey(0)
    keys = jax.random.split(key, 8)

    # ---------- small demo mirroring EqualLinear(32, 16, lr_mul=0.5), batch 8 ----------
    B, in_dim, out_dim = 8, 32, 16
    lr_mul = 0.5
    weight = jax.random.normal(keys[0], (out_dim, in_dim), dtype=jnp.float32) / lr_mul
    bias = jnp.zeros((out_dim,), jnp.float32)            # bias_init = 0
    x = jax.random.normal(keys[1], (B, in_dim), dtype=jnp.float32)

    # One-time parameter prep (hoisted off the per-call hot path).
    p_lin = prepare_equal_linear(weight, bias, lr_mul=lr_mul, activation=None)
    p_act = prepare_equal_linear(weight, bias, lr_mul=lr_mul, activation="fused_lrelu")

    out_lin = jax.block_until_ready(equal_linear(p_lin, x))
    ref_lin = equal_linear_ref(x, weight, bias, lr_mul=lr_mul, activation=None)
    assert jnp.allclose(out_lin, ref_lin, atol=1e-5, rtol=1e-5)

    out_act = jax.block_until_ready(equal_linear(p_act, x))
    ref_act = equal_linear_ref(x, weight, bias, lr_mul=lr_mul, activation="fused_lrelu")
    assert jnp.allclose(out_act, ref_act, atol=1e-5, rtol=1e-5)

    # ---------- moderate shapes exercising the multi-K (M, N, K) accumulator path ----------
    B2, in2, out2 = 384, 640, 384
    w2 = jax.random.normal(keys[2], (out2, in2), dtype=jnp.float32)
    b2 = jax.random.normal(keys[3], (out2,), dtype=jnp.float32)
    x2 = jax.random.normal(keys[4], (B2, in2), dtype=jnp.float32)

    p2_act = prepare_equal_linear(w2, b2, lr_mul=1.0, activation="fused_lrelu")
    out2_act = jax.block_until_ready(
        equal_linear(p2_act, x2, tm=128, tn=256, tk=256))   # small tk forces K loop
    ref2_act = equal_linear_ref(x2, w2, b2, lr_mul=1.0, activation="fused_lrelu")
    assert jnp.allclose(out2_act, ref2_act, atol=1e-4, rtol=1e-4)

    # bias=None path (no bias operand / DMA), default tiles -> single-K fast path
    p2_nob = prepare_equal_linear(w2, None, lr_mul=1.0, activation=None)
    out2_nob = jax.block_until_ready(equal_linear(p2_nob, x2))
    ref2_nob = equal_linear_ref(x2, w2, None, lr_mul=1.0, activation=None)
    assert jnp.allclose(out2_nob, ref2_nob, atol=1e-4, rtol=1e-4)

    # ---------- bf16 operands, tiny batch (mapping-net-like): fast path + N split ----------
    B3, in3, out3 = 8, 512, 512
    w3 = jax.random.normal(keys[5], (out3, in3), dtype=jnp.float32)
    b3 = jax.random.normal(keys[6], (out3,), dtype=jnp.float32)
    x3 = jax.random.normal(keys[7], (B3, in3), dtype=jnp.float32).astype(jnp.bfloat16)

    p3 = prepare_equal_linear(w3, b3, lr_mul=1.0, activation="fused_lrelu",
                              param_dtype=jnp.bfloat16)
    out3 = jax.block_until_ready(equal_linear(p3, x3))
    ref3 = equal_linear_ref(x3.astype(jnp.float32),
                            w3.astype(jnp.bfloat16).astype(jnp.float32),
                            b3, lr_mul=1.0, activation="fused_lrelu")
    assert jnp.allclose(out3.astype(jnp.float32), ref3, atol=3e-2, rtol=3e-2)

    print("KERNEL_OK")
</pallas_src>

<mosaic_0001>
module attributes {stable_mosaic.version = 11 : i64} {
  func.func @_equal_linear_kernel_1k(%arg0: i32, %arg1: i32, %arg2: memref<8x128xf32, #tpu.memory_space<vmem>>, %arg3: memref<128x128xf32, #tpu.memory_space<vmem>>, %arg4: memref<1x128xf32, #tpu.memory_space<vmem>>, %arg5: memref<8x128xf32, #tpu.memory_space<vmem>>) attributes {dimension_semantics = [#tpu.dimension_semantics<parallel>, #tpu.dimension_semantics<parallel>], iteration_bounds = array<i64: 1, 1>, scalar_prefetch = 0 : i64, scratch_operands = 0 : i64, tpu.core_type = #tpu.core_type<tc>, window_params = [{transform_indices = @transform_0, window_bounds = array<i64: 8, 128>}, {transform_indices = @transform_1, window_bounds = array<i64: 128, 128>}, {transform_indices = @transform_2, window_bounds = array<i64: 1, 128>}, {transform_indices = @transform_3, window_bounds = array<i64: 8, 128>}]} {
    %c0 = arith.constant 0 : index
    %c0_0 = arith.constant 0 : index
    %0 = vector.load %arg2[%c0, %c0_0] : memref<8x128xf32, #tpu.memory_space<vmem>>, vector<8x128xf32>
    %c0_1 = arith.constant 0 : index
    %c0_2 = arith.constant 0 : index
    %1 = vector.load %arg3[%c0_1, %c0_2] : memref<128x128xf32, #tpu.memory_space<vmem>>, vector<128x128xf32>
    %cst = arith.constant dense<0.000000e+00> : vector<8x128xf32>
    %2 = tpu.matmul %0, %1, %cst {dimension_numbers = #tpu.dot_dimension_numbers<[1], [0], [0], [1], [0, 0, 1, 1], [], []>} : vector<8x128xf32>, vector<128x128xf32>, vector<8x128xf32> -> vector<8x128xf32>
    %cst_3 = arith.constant 0.0883883461 : f32
    %3 = vector.broadcast %cst_3 : f32 to vector<8x128xf32>
    %4 = arith.mulf %2, %3 : vector<8x128xf32>
    %c0_4 = arith.constant 0 : index
    %c0_5 = arith.constant 0 : index
    %5 = vector.load %arg4[%c0_4, %c0_5] : memref<1x128xf32, #tpu.memory_space<vmem>>, vector<1x128xf32>
    %6 = vector.broadcast %5 : vector<1x128xf32> to vector<8x128xf32>
    %7 = arith.addf %4, %6 : vector<8x128xf32>
    %c0_6 = arith.constant 0 : index
    %c0_7 = arith.constant 0 : index
    %8 = vector.load %arg5[%c0_6, %c0_7] : memref<8x128xf32, #tpu.memory_space<vmem>>, vector<8x128xf32>
    tpu.vector_store %arg5[%c0_6, %c0_7], %7 {strides = array<i32>} : memref<8x128xf32, #tpu.memory_space<vmem>>, vector<8x128xf32>,
    return
  }
  func.func @transform_0(%arg0: i32, %arg1: i32) -> (i32, i32) {
    %c0_i32 = arith.constant 0 : i32
    %c0_i32_0 = arith.constant 0 : i32
    return %arg0, %c0_i32 : i32, i32
  }
  func.func @transform_1(%arg0: i32, %arg1: i32) -> (i32, i32) {
    %c0_i32 = arith.constant 0 : i32
    %c0_i32_0 = arith.constant 0 : i32
    return %c0_i32, %arg1 : i32, i32
  }
  func.func @transform_2(%arg0: i32, %arg1: i32) -> (i32, i32) {
    %c0_i32 = arith.constant 0 : i32
    %c0_i32_0 = arith.constant 0 : i32
    return %c0_i32, %arg1 : i32, i32
  }
  func.func @transform_3(%arg0: i32, %arg1: i32) -> (i32, i32) {
    %c0_i32 = arith.constant 0 : i32
    return %arg0, %arg1 : i32, i32
  }
}

</mosaic_0001>

<llo_original>
// kernel: tpu_custom_call.1
$region0: #{tpu_custom_call.1}
  #allocation0 [shape = 'u32[]', space=smem, size = 0x4, offset = 0x4, fixed_abs, tag = 'smem constant byte address 0x4 - core index']
  #allocation1 [shape = 'u32[144,128]{1,0:T(1,128)}', space=vmem, size = 0x12000, scoped, tag = 'internal scratch']
  %s0 = inlined_call_operand.hbm [shape: f32[8,128], index: 0, kind: input, shape index: {}]
  %s1 = inlined_call_operand.hbm [shape: f32[128,128], index: 1, kind: input, shape index: {}]
  %s2 = inlined_call_operand.vmem [shape: f32[1,128], index: 2, kind: input, shape index: {}]
  %s3 = inlined_call_operand.hbm [shape: f32[8,128], index: 3, kind: output, shape index: {}]
  %s4 = sld [smem:[#allocation0]]
  $region30: #{tpu_custom_call.1} parent=0
    _
  %s6 = ssub.s32 1, %s4
  %s7 = scalar_select 0, %s6, %s4
  $region1: #{tpu_custom_call.1} parent=0
    #allocation2 [shape = 'u8[4096]{0}', space=vmem, size = 0x1000, scoped, tag = 'input window, operand 0, single buffered']
    #allocation3 [shape = 's32[1]{0}', space=sflag, size = 0x4, scoped, tag = 'scoped memory for tpu_custom_call.1']
    #allocation4 [shape = 's32[1]{0}', space=sflag, size = 0x4, scoped, tag = 'scoped memory for tpu_custom_call.1']
    #allocation5 [shape = 'u8[65536]{0}', space=vmem, size = 0x10000, scoped, tag = 'input window, operand 1, single buffered']
    #allocation6 [shape = 's32[1]{0}', space=sflag, size = 0x4, scoped, tag = 'scoped memory for tpu_custom_call.1']
    #allocation7 [shape = 'u8[4096]{0}', space=vmem, size = 0x1000, scoped, tag = 'output window, operand 0, single buffered']
    %8 = vsyncpa [#allocation3], 0
    %9 = vsyncpa [#allocation6], 0
    %10 = vsyncpa [#allocation4], 0
    // Predicated region
    $region2: #{tpu_custom_call.1} parent=1 // pred_check
      _
    $region3: #{tpu_custom_call.1} parent=1 // pred_check_branch
      %12 = sbr.rel (0) target = $region5
    $region4: #{tpu_custom_call.1} parent=1 // pred_region
      %s14 = ssub.s32 128, 128
      %15 = vsyncadd [#allocation3], %s14
      %s17 = sshll.u32 [#allocation2], 4
      %s18 = int_to_ptr.vmem [resolvable:$true] %s17
      %20 = dma.hbm_to_vmem [thread:$0]  %s0, 128, %s18, [#allocation3]
    $region5: #{tpu_custom_call.1} parent=1 // pred_fallthru
      _
    // Predicated region
    $region6: #{tpu_custom_call.1} parent=1 // pred_check
      _
    $region7: #{tpu_custom_call.1} parent=1 // pred_check_branch
      %22 = sbr.rel (0) target = $region9
    $region8: #{tpu_custom_call.1} parent=1 // pred_region
      %s24 = ssub.s32 2048, 2048
      %25 = vsyncadd [#allocation6], %s24
      %s26 = sshll.u32 [#allocation5], 4
      %s27 = int_to_ptr.vmem [resolvable:$true] %s26
      %32 = dma.hbm_to_vmem [thread:$0]  %s1, 2048, %s27, [#allocation6], 128, 128, 8
    $region9: #{tpu_custom_call.1} parent=1 // pred_fallthru
      _
    // Predicated region
    $region10: #{tpu_custom_call.1} parent=1 // pred_check
      _
    $region11: #{tpu_custom_call.1} parent=1 // pred_check_branch
      %34 = sbr.rel (0) target = $region13
    $region12: #{tpu_custom_call.1} parent=1 // pred_region
      _
    $region13: #{tpu_custom_call.1} parent=1 // pred_fallthru
      _
    // Predicated region
    $region14: #{tpu_custom_call.1} parent=1 // pred_check
      _
    $region15: #{tpu_custom_call.1} parent=1 // pred_check_branch
      %36 = sbr.rel (0) target = $region17
    $region16: #{tpu_custom_call.1} parent=1 // pred_region
      %37 = dma.done [#allocation3], 128
    $region17: #{tpu_custom_call.1} parent=1 // pred_fallthru
      _
    // Predicated region
    $region18: #{tpu_custom_call.1} parent=1 // pred_check
      _
    $region19: #{tpu_custom_call.1} parent=1 // pred_check_branch
      %39 = sbr.rel (0) target = $region21
    $region20: #{tpu_custom_call.1} parent=1 // pred_region
      %40 = dma.done [#allocation6], 2048
    $region21: #{tpu_custom_call.1} parent=1 // pred_fallthru
      _
    %v41 = vld [vmem:[#allocation2] sm:$0xff]
    %v42 = vld [vmem:[#allocation5] sm:$0xff]
    %v43 = vld [vmem:[#allocation5 + $0x8] sm:$0xff]
    %v44 = vld [vmem:[#allocation5 + $0x10] sm:$0xff]
    %v45 = vld [vmem:[#allocation5 + $0x18] sm:$0xff]
    %v46 = vld [vmem:[#allocation5 + $0x20] sm:$0xff]
    %v47 = vld [vmem:[#allocation5 + $0x28] sm:$0xff]
    %v48 = vld [vmem:[#allocation5 + $0x30] sm:$0xff]
    %v49 = vld [vmem:[#allocation5 + $0x38] sm:$0xff]
    %v50 = vld [vmem:[#allocation5 + $0x40] sm:$0xff]
    %v51 = vld [vmem:[#allocation5 + $0x48] sm:$0xff]
    %v52 = vld [vmem:[#allocation5 + $0x50] sm:$0xff]
    %v53 = vld [vmem:[#allocation5 + $0x58] sm:$0xff]
    %v54 = vld [vmem:[#allocation5 + $0x60] sm:$0xff]
    %v55 = vld [vmem:[#allocation5 + $0x68] sm:$0xff]
    %v56 = vld [vmem:[#allocation5 + $0x70] sm:$0xff]
    %v57 = vld [vmem:[#allocation5 + $0x78] sm:$0xff]
    %58 = vmatprep.subr.mxu0 0.0
    %59 = vmatpush1.msra.mxu0 %v42
    %60 = vmatprep.subr.mxu0 0.0
    %61 = vmatpush1.msra.mxu0 %v43
    %62 = vmatprep.subr.mxu0 0.0
    %63 = vmatpush1.msra.mxu0 %v44
    %64 = vmatprep.subr.mxu0 0.0
    %65 = vmatpush1.msra.mxu0 %v45
    %66 = vmatprep.subr.mxu0 0.0
    %67 = vmatpush1.msra.mxu0 %v46
    %68 = vmatprep.subr.mxu0 0.0
    %69 = vmatpush1.msra.mxu0 %v47
    %70 = vmatprep.subr.mxu0 0.0
    %71 = vmatpush1.msra.mxu0 %v48
    %72 = vmatprep.subr.mxu0 0.0
    %73 = vmatpush1.msra.mxu0 %v49
    %74 = vmatprep.subr.mxu0 0.0
    %75 = vmatpush1.msra.mxu0 %v50
    %76 = vmatprep.subr.mxu0 0.0
    %77 = vmatpush1.msra.mxu0 %v51
    %78 = vmatprep.subr.mxu0 0.0
    %79 = vmatpush1.msra.mxu0 %v52
    %80 = vmatprep.subr.mxu0 0.0
    %81 = vmatpush1.msra.mxu0 %v53
    %82 = vmatprep.subr.mxu0 0.0
    %83 = vmatpush1.msra.mxu0 %v54
    %84 = vmatprep.subr.mxu0 0.0
    %85 = vmatpush1.msra.mxu0 %v55
    %86 = vmatprep.subr.mxu0 0.0
    %87 = vmatpush1.msra.mxu0 %v56
    %88 = vmatprep.subr.mxu0 0.0
    %89 = vmatpush1.msra.mxu0 %v57
    %90 = vmatprep.subr.mxu0 0.0
    %91 = vmatpush1.msra.mxu0 0.0
    %92 = vmatprep.subr.mxu0 0.0
    %93 = vmatpush1.msra.mxu0 0.0
    %94 = vmatprep.subr.mxu0 0.0
    %95 = vmatpush1.msra.mxu0 0.0
    %96 = vmatprep.subr.mxu0 0.0
    %97 = vmatpush1.msra.mxu0 0.0
    %98 = vmatprep.subr.mxu0 0.0
    %99 = vmatpush1.msra.mxu0 0.0
    %100 = vmatprep.subr.mxu0 0.0
    %101 = vmatpush1.msra.mxu0 0.0
    %102 = vmatprep.subr.mxu0 0.0
    %103 = vmatpush1.msra.mxu0 0.0
    %104 = vmatprep.subr.mxu0 0.0
    %105 = vmatpush1.msra.mxu0 0.0
    %106 = vmatprep.subr.mxu0 0.0
    %107 = vmatpush1.msra.mxu0 0.0
    %108 = vmatprep.subr.mxu0 0.0
    %109 = vmatpush1.msra.mxu0 0.0
    %110 = vmatprep.subr.mxu0 0.0
    %111 = vmatpush1.msra.mxu0 0.0
    %112 = vmatprep.subr.mxu0 0.0
    %113 = vmatpush1.msra.mxu0 0.0
    %114 = vmatprep.subr.mxu0 0.0
    %115 = vmatpush1.msra.mxu0 0.0
    %116 = vmatprep.subr.mxu0 0.0
    %117 = vmatpush1.msra.mxu0 0.0
    %118 = vmatprep.subr.mxu0 0.0
    %119 = vmatpush1.msra.mxu0 0.0
    %120 = vmatprep.subr.mxu0 0.0
    %121 = vmatpush1.msra.mxu0 0.0
    %122 = vmatprep.mubr.f32.mxu0 0.0
    %123 = vmatmul.mubr.f32.gmra.mrb[0].mxu0 %v41
    %v124 = vpop.f32.mrb[0].mxu0
    %v125 = vadd.f32 0.0, %v124
    %v126 = vpop.f32.mrb[0].mxu0
    %127 = vdwg.mxu0
    %v128 = vmul.f32 %v125, 0.088388346
    %v129 = vld [vmem:[%s2] sm:$0x1]
    %v131 = vlaneseq
    %v132 = vshrl.u32 %v131, 7
    %v133 = vsub.s32 0, %v132
    %v134 = vrot.slane %v129, %v133
    %v136 = vadd.f32 %v128, %v134
    %137 = vst [vmem:[#allocation7] sm:$0xff] %v136
    // Predicated region
    $region22: #{tpu_custom_call.1} parent=1 // pred_check
      _
    $region23: #{tpu_custom_call.1} parent=1 // pred_check_branch
      %139 = sbr.rel (0) target = $region25
    $region24: #{tpu_custom_call.1} parent=1 // pred_region
      %s141 = ssub.s32 128, 128
      %142 = vsyncadd [#allocation4], %s141
      %s144 = sshll.u32 [#allocation7], 4
      %s145 = int_to_ptr.vmem [resolvable:$true] %s144
      %147 = dma.vmem_to_hbm [thread:$0]  %s145, 128, %s3, [#allocation4]
    $region25: #{tpu_custom_call.1} parent=1 // pred_fallthru
      _
    // Predicated region
    $region26: #{tpu_custom_call.1} parent=1 // pred_check
      _
    $region27: #{tpu_custom_call.1} parent=1 // pred_check_branch
      %149 = sbr.rel (0) target = $region29
    $region28: #{tpu_custom_call.1} parent=1 // pred_region
      %150 = dma.done [#allocation4], 128
    $region29: #{tpu_custom_call.1} parent=1 // pred_fallthru
      _
    %151 = vsyncpa [#allocation3], 1
    %152 = vsyncpa [#allocation6], 1
    %153 = vsyncpa [#allocation4], 1

</llo_original>
